<compile_context>
chip_gen: v6e
topology: v6e:2x2x1
jax: 0.10.0
libtpu: 0.0.40
codegen_flags: <defaults>
</compile_context>

<pallas_src>
import jax
import jax.numpy as jnp
from jax import lax
from jax.experimental import pallas as pl
from jax.experimental.pallas import tpu as pltpu

BN_EPS = 1e-5
LANE = 128


def _round_up(x, m):
    return (x + m - 1) // m * m


def _choose_tb(B, tb):
    """Batch tile: multiple of 8, <= padded batch, and >=2 grid steps when possible (v7x)."""
    B8 = _round_up(max(int(B), 1), 8)
    tb_eff = max(8, min(_round_up(int(tb), 8), B8))
    if B8 // tb_eff < 2 and B8 >= 16:
        tb_eff = _round_up((B8 + 1) // 2, 8)
    return tb_eff


# ----------------------------------------------------------------------------- kernel
def make_tabular_kernel(num_layers, n_cat_w, fuse_emb):
    """num_layers = number of Linear layers. All BN folded into the Linears already."""

    def kernel(*refs):
        x_first_ref, x_cont_ref = refs[0], refs[1]
        cat_w = refs[2:2 + n_cat_w]
        w0c_ref, b0_ref = refs[2 + n_cat_w], refs[3 + n_cat_w]
        wb = refs[4 + n_cat_w:-1]
        out_ref = refs[-1]
        tb = x_cont_ref.shape[0]

        # Layer 0, continuous part (bn_cont folded into w0c/b0). bf16 x bf16 -> f32 acc.
        h = jnp.dot(x_cont_ref[...], w0c_ref[...], preferred_element_type=jnp.float32)

        if fuse_emb:
            # Embedding lookup fused with the first Linear:
            # onehot(x_cat[:,t]) @ (table_t @ W0_emb_slice_t)  — exact row select on the MXU.
            xcat = x_first_ref[...]
            for t in range(n_cat_w):
                ni = cat_w[t].shape[0]
                onehot = (xcat[:, t:t + 1]
                          == lax.broadcasted_iota(jnp.int32, (tb, ni), 1)
                          ).astype(jnp.bfloat16)
                h = h + jnp.dot(onehot, cat_w[t][...],
                                preferred_element_type=jnp.float32)
        else:
            # Fallback: pre-gathered bf16 embeddings.
            h = h + jnp.dot(x_first_ref[...], cat_w[0][...],
                            preferred_element_type=jnp.float32)

        h = h + b0_ref[...]
        if num_layers > 1:
            h = jnp.maximum(h, 0.0)

        # Remaining (BN-folded) Linear layers; ReLU on all but the last.
        for i in range(num_layers - 1):
            w = wb[2 * i][...]                 # bf16, stays bf16 (native MXU path)
            b = wb[2 * i + 1][...]             # f32
            h = jnp.dot(h.astype(jnp.bfloat16), w,
                        preferred_element_type=jnp.float32) + b
            if i < num_layers - 2:
                h = jnp.maximum(h, 0.0)

        out_ref[...] = h.astype(out_ref.dtype)

    return kernel


# --------------------------------------------------------------------- param preparation
def prepare_params(emb_tables, params, lane=LANE, fuse_emb=True,
                   param_dtype=jnp.bfloat16):
    """Fold eval-mode BN into adjacent Linears, optionally fold the embedding tables into
    the first Linear (per-table effective weights), pad hidden widths to `lane`, quantize
    weights to bf16 (biases stay f32).

    Returns (cat_ws, w0c, b0, rest_flat) where rest_flat = [w1, b1, w2, b2, ...]."""

    def bn_affine(bn):
        g, b, m, v = bn.astype(jnp.float32)
        s = g * lax.rsqrt(v + BN_EPS)
        return s, b - m * s

    w0e = params["w0_emb"].astype(jnp.float32)              # (n_emb, n1)
    w0c_raw = params["w0_cont"].astype(jnp.float32)         # (n_cont, n1)
    b0 = params["b0"].astype(jnp.float32).reshape(1, -1)    # (1, n1)

    # Fold bn_cont into the continuous half of layer 0.
    sc, sh = bn_affine(params["bn_cont"])
    w0c = sc[:, None] * w0c_raw
    b0 = b0 + sh @ w0c_raw

    rest = params["rest"]
    n1 = w0e.shape[1]
    n1p = n1 if len(rest) == 0 else _round_up(n1, lane)      # last-layer width stays unpadded

    def pad_cols(a, n_to):
        return jnp.pad(a, ((0, 0), (0, n_to - a.shape[1])))

    w0e_p = pad_cols(w0e, n1p)                                # f32 (folded below)
    w0c_p = pad_cols(w0c, n1p).astype(param_dtype)
    b0_p = pad_cols(b0, n1p)                                  # f32

    if fuse_emb:
        cat_ws, off = [], 0
        for t in emb_tables:
            nf = t.shape[1]
            cat_ws.append((t.astype(jnp.float32) @ w0e_p[off:off + nf]).astype(param_dtype))
            off += nf
    else:
        cat_ws = [w0e_p.astype(param_dtype)]

    # Hidden / output layers: fold their leading BN, pad K to prev width / N to lane
    # (except the last layer, whose N stays = out_sz), quantize.
    rest_flat = []
    prev_p = n1p
    for li, (bn_i, w_i, b_i) in enumerate(rest):
        s, t = bn_affine(bn_i)
        w32 = w_i.astype(jnp.float32)
        w_f = s[:, None] * w32
        b_f = b_i.astype(jnp.float32).reshape(1, -1) + t @ w32
        n_out = w_f.shape[1]
        n_out_p = n_out if li == len(rest) - 1 else _round_up(n_out, lane)
        w_p = jnp.zeros((prev_p, n_out_p), jnp.float32).at[:w_f.shape[0], :n_out].set(w_f)
        b_p = jnp.zeros((1, n_out_p), jnp.float32).at[:, :n_out].set(b_f)
        rest_flat += [w_p.astype(param_dtype), b_p]
        prev_p = n_out_p

    return cat_ws, w0c_p, b0_p, rest_flat


# ----------------------------------------------------------------------------- wrapper
def tabular_forward_pallas(x_cat, x_cont, emb_tables, params, out_sz, tb=1024,
                           fuse_emb=None, param_dtype=jnp.bfloat16,
                           act_dtype=jnp.bfloat16):
    """x_cat (B, n_cat) int, x_cont (B, n_cont) f32. Eval-mode forward of TabularModel."""
    B, n_cont = x_cont.shape
    if fuse_emb is None:
        # One-hot fusion only pays for modest vocabularies; otherwise gather in the wrapper.
        fuse_emb = max(t.shape[0] for t in emb_tables) <= 1024

    cat_ws, w0c, b0, rest_flat = prepare_params(
        emb_tables, params, fuse_emb=fuse_emb, param_dtype=param_dtype)
    num_layers = 1 + len(rest_flat) // 2
    out_w = (rest_flat[-1] if rest_flat else b0).shape[1]
    assert out_w == out_sz

    tb_eff = _choose_tb(B, tb)
    B_pad = _round_up(B, tb_eff)

    if fuse_emb:
        x_first = x_cat.astype(jnp.int32)                          # (B, n_cat)
    else:
        x_emb = jnp.concatenate(
            [jnp.take(t, x_cat[:, i], axis=0) for i, t in enumerate(emb_tables)], axis=1)
        x_first = x_emb.astype(act_dtype)                          # (B, n_emb)
    xc = x_cont.astype(act_dtype)                                  # (B, n_cont), no BN (folded)

    if B_pad != B:  # padded rows are garbage-but-finite and sliced off below
        x_first = jnp.pad(x_first, ((0, B_pad - B), (0, 0)))
        xc = jnp.pad(xc, ((0, B_pad - B), (0, 0)))

    consts = list(cat_ws) + [w0c, b0] + rest_flat
    batch_map = lambda i: (i, 0)
    const_map = lambda i: (0, 0)
    in_specs = [pl.BlockSpec((tb_eff, x_first.shape[1]), batch_map),
                pl.BlockSpec((tb_eff, n_cont), batch_map)]
    # Constant (grid-invariant) weight blocks stay resident across grid steps.
    # (pl.Buffered(1) on these specs would shave their double-buffer VMEM further.)
    in_specs += [pl.BlockSpec(a.shape, const_map) for a in consts]

    # Explicit VMEM budget: bf16 weights + f32 biases + double-buffered I/O tiles + h temps.
    const_bytes = sum(a.size * a.dtype.itemsize for a in consts)
    max_w = max([w0c.shape[1]] + [a.shape[1] for a in rest_flat[::2]] + [1])
    io_bytes = 2 * tb_eff * (x_first.shape[1] * x_first.dtype.itemsize
                             + n_cont * xc.dtype.itemsize + out_sz * 4)
    act_bytes = 4 * tb_eff * max_w * 4
    vmem_limit = int(min(100 << 20,
                         max(32 << 20, 2 * const_bytes + io_bytes + act_bytes + (4 << 20))))

    out = pl.pallas_call(
        make_tabular_kernel(num_layers, len(cat_ws), fuse_emb),
        out_shape=jax.ShapeDtypeStruct((B_pad, out_sz), jnp.float32),
        grid=(B_pad // tb_eff,),
        in_specs=in_specs,
        out_specs=pl.BlockSpec((tb_eff, out_sz), batch_map),
        compiler_params=pltpu.CompilerParams(
            dimension_semantics=("parallel",),
            vmem_limit_bytes=vmem_limit),
    )(x_first, xc, *consts)

    return out[:B]


# ---------------------------------------------------------------------------- references
def tabular_forward_ref(x_cat, x_cont, emb_tables, params):
    """Original (unfolded) eval-mode TabularModel semantics in pure f32 JAX."""
    def bn(x, p):
        g, b, m, v = p
        return (x - m) / jnp.sqrt(v + BN_EPS) * g + b

    x_emb = jnp.concatenate(
        [jnp.take(t, x_cat[:, i], axis=0) for i, t in enumerate(emb_tables)], axis=1)
    xc = bn(x_cont, params["bn_cont"])
    h = x_emb @ params["w0_emb"] + xc @ params["w0_cont"] + params["b0"]
    num_layers = 1 + len(params["rest"])
    if num_layers > 1:
        h = jnp.maximum(h, 0.0)
    for i, (bn_i, w_i, b_i) in enumerate(params["rest"]):
        h = bn(h, bn_i)
        h = h @ w_i + b_i
        if i < num_layers - 2:
            h = jnp.maximum(h, 0.0)
    return h


def tabular_forward_ref_folded(x_cat, x_cont, emb_tables, params, out_sz,
                               fuse_emb=True, param_dtype=jnp.bfloat16):
    """Mirror of the kernel math (folded + padded + bf16 weights/activations) in pure JAX."""
    cat_ws, w0c, b0, rest_flat = prepare_params(
        emb_tables, params, fuse_emb=fuse_emb, param_dtype=param_dtype)
    f32 = jnp.float32
    xc = x_cont.astype(jnp.bfloat16).astype(f32)
    h = xc @ w0c.astype(f32)
    if fuse_emb:
        for t, T in enumerate(cat_ws):
            h = h + jnp.take(T.astype(f32), x_cat[:, t], axis=0)
    else:
        x_emb = jnp.concatenate(
            [jnp.take(tab, x_cat[:, i], axis=0) for i, tab in enumerate(emb_tables)], axis=1)
        h = h + x_emb.astype(jnp.bfloat16).astype(f32) @ cat_ws[0].astype(f32)
    h = h + b0
    num_layers = 1 + len(rest_flat) // 2
    if num_layers > 1:
        h = jnp.maximum(h, 0.0)
    for i in range(num_layers - 1):
        w = rest_flat[2 * i].astype(f32)
        b = rest_flat[2 * i + 1]
        h = h.astype(jnp.bfloat16).astype(f32) @ w + b
        if i < num_layers - 2:
            h = jnp.maximum(h, 0.0)
    return h[:, :out_sz]


# -------------------------------------------------------------------------------- demo
if __name__ == "__main__":
    # Small config consistent with TabularModel.__init__.
    emb_szs = [(10, 3), (8, 4)]      # (num_embeddings, embedding_dim)
    n_cont = 5
    layers = [32, 16]
    out_sz = 2
    B = 64

    n_emb = sum(nf for _, nf in emb_szs)              # 7
    sizes = [n_emb + n_cont] + layers + [out_sz]      # [12, 32, 16, 2]

    key = jax.random.PRNGKey(0)
    ks = iter(jax.random.split(key, 64))

    emb_tables = [0.01 * jax.random.normal(next(ks), (ni, nf), jnp.float32)
                  for ni, nf in emb_szs]

    def make_bn(k, n):
        k1, k2, k3, k4 = jax.random.split(k, 4)
        gamma = 1.0 + 0.1 * jax.random.normal(k1, (n,), jnp.float32)
        beta = 0.1 * jax.random.normal(k2, (n,), jnp.float32)
        mean = 0.1 * jax.random.normal(k3, (n,), jnp.float32)
        var = 0.5 + 0.5 * jnp.abs(jax.random.normal(k4, (n,), jnp.float32))
        return jnp.stack([gamma, beta, mean, var], axis=0)   # (4, n)

    def make_linear(k, n_in, n_out):
        k1, k2 = jax.random.split(k)
        bound = 1.0 / jnp.sqrt(float(n_in))
        w = jax.random.uniform(k1, (n_in, n_out), jnp.float32, -bound, bound)
        b = jax.random.uniform(k2, (1, n_out), jnp.float32, -bound, bound)
        return w, b

    bn_cont = make_bn(next(ks), n_cont)
    w0, b0 = make_linear(next(ks), sizes[0], sizes[1])
    params = {
        "bn_cont": bn_cont,
        "w0_emb": w0[:n_emb, :],
        "w0_cont": w0[n_emb:, :],
        "b0": b0,
        "rest": [],
    }
    for n_in, n_out in zip(sizes[1:-1], sizes[2:]):
        params["rest"].append((make_bn(next(ks), n_in),) + make_linear(next(ks), n_in, n_out))

    # Deterministic inputs.
    x_cat = jnp.stack(
        [jax.random.randint(next(ks), (B,), 0, ni) for ni, _ in emb_szs], axis=1
    ).astype(jnp.int32)                                 # (B, num_cat)
    x_cont = jax.random.normal(next(ks), (B, n_cont), jnp.float32)

    # Fused-embedding kernel (default path).
    out = tabular_forward_pallas(x_cat, x_cont, emb_tables, params, out_sz)
    out = jax.block_until_ready(out)
    assert out.shape == (B, out_sz)

    # Tight check: kernel vs identical folded/bf16 math in pure JAX.
    ref_folded = tabular_forward_ref_folded(x_cat, x_cont, emb_tables, params, out_sz)
    assert jnp.allclose(out, ref_folded, atol=1e-2, rtol=1e-2), "mismatch vs folded reference"

    # Semantics check: kernel vs original unfolded f32 reference (looser: bf16 params/acts).
    ref = tabular_forward_ref(x_cat, x_cont, emb_tables, params)
    assert jnp.allclose(out, ref, atol=5e-2, rtol=5e-2), "mismatch vs original-semantics reference"

    # Multi-step grid (several batch tiles) must match exactly.
    out_tiled = jax.block_until_ready(
        tabular_forward_pallas(x_cat, x_cont, emb_tables, params, out_sz, tb=16))
    assert jnp.allclose(out, out_tiled, atol=1e-5, rtol=1e-5), "tiled-grid mismatch"

    # Non-fused fallback path (wrapper-side gather) must also match semantics.
    out_nofuse = jax.block_until_ready(
        tabular_forward_pallas(x_cat, x_cont, emb_tables, params, out_sz, fuse_emb=False))
    assert jnp.allclose(out_nofuse, ref, atol=5e-2, rtol=5e-2), "fallback-path mismatch"

    print("KERNEL_OK")
</pallas_src>

<mosaic_0001>
module attributes {stable_mosaic.version = 11 : i64} {
  func.func @kernel(%arg0: i32, %arg1: memref<32x2xi32, #tpu.memory_space<vmem>>, %arg2: memref<32x5xbf16, #tpu.memory_space<vmem>>, %arg3: memref<10x128xbf16, #tpu.memory_space<vmem>>, %arg4: memref<8x128xbf16, #tpu.memory_space<vmem>>, %arg5: memref<5x128xbf16, #tpu.memory_space<vmem>>, %arg6: memref<1x128xf32, #tpu.memory_space<vmem>>, %arg7: memref<128x128xbf16, #tpu.memory_space<vmem>>, %arg8: memref<1x128xf32, #tpu.memory_space<vmem>>, %arg9: memref<128x2xbf16, #tpu.memory_space<vmem>>, %arg10: memref<1x2xf32, #tpu.memory_space<vmem>>, %arg11: memref<32x2xf32, #tpu.memory_space<vmem>>) attributes {dimension_semantics = [#tpu.dimension_semantics<parallel>], iteration_bounds = array<i64: 2>, scalar_prefetch = 0 : i64, scratch_operands = 0 : i64, tpu.core_type = #tpu.core_type<tc>, window_params = [{transform_indices = @transform_0, window_bounds = array<i64: 32, 2>}, {transform_indices = @transform_1, window_bounds = array<i64: 32, 5>}, {pipeline_mode = #tpu.pipeline_mode<synchronous>, transform_indices = @transform_2, window_bounds = array<i64: 10, 128>}, {pipeline_mode = #tpu.pipeline_mode<synchronous>, transform_indices = @transform_3, window_bounds = array<i64: 8, 128>}, {pipeline_mode = #tpu.pipeline_mode<synchronous>, transform_indices = @transform_4, window_bounds = array<i64: 5, 128>}, {pipeline_mode = #tpu.pipeline_mode<synchronous>, transform_indices = @transform_5, window_bounds = array<i64: 1, 128>}, {pipeline_mode = #tpu.pipeline_mode<synchronous>, transform_indices = @transform_6, window_bounds = array<i64: 128, 128>}, {pipeline_mode = #tpu.pipeline_mode<synchronous>, transform_indices = @transform_7, window_bounds = array<i64: 1, 128>}, {pipeline_mode = #tpu.pipeline_mode<synchronous>, transform_indices = @transform_8, window_bounds = array<i64: 128, 2>}, {pipeline_mode = #tpu.pipeline_mode<synchronous>, transform_indices = @transform_9, window_bounds = array<i64: 1, 2>}, {transform_indices = @transform_10, window_bounds = array<i64: 32, 2>}]} {
    %c0 = arith.constant 0 : index
    %c0_0 = arith.constant 0 : index
    %0 = vector.load %arg2[%c0, %c0_0] : memref<32x5xbf16, #tpu.memory_space<vmem>>, vector<32x5xbf16>
    %c0_1 = arith.constant 0 : index
    %c0_2 = arith.constant 0 : index
    %1 = vector.load %arg5[%c0_1, %c0_2] : memref<5x128xbf16, #tpu.memory_space<vmem>>, vector<5x128xbf16>
    %cst = arith.constant dense<0.000000e+00> : vector<32x128xf32>
    %2 = tpu.matmul %0, %1, %cst {dimension_numbers = #tpu.dot_dimension_numbers<[1], [0], [0], [1], [0, 0, 1, 1], [], []>} : vector<32x5xbf16>, vector<5x128xbf16>, vector<32x128xf32> -> vector<32x128xf32>
    %c0_3 = arith.constant 0 : index
    %c0_4 = arith.constant 0 : index
    %3 = vector.load %arg1[%c0_3, %c0_4] : memref<32x2xi32, #tpu.memory_space<vmem>>, vector<32x2xi32>
    %4 = vector.extract_strided_slice %3 {offsets = [0, 0], sizes = [32, 1], strides = [1, 1]} : vector<32x2xi32> to vector<32x1xi32>
    %5 = tpu.iota {dimensions = array<i32: 1>} : vector<32x10xi32>
    %6 = vector.broadcast %4 : vector<32x1xi32> to vector<32x10xi32>
    %7 = arith.cmpi eq, %6, %5 : vector<32x10xi32>
    %8 = arith.extui %7 : vector<32x10xi1> to vector<32x10xi32>
    %9 = arith.sitofp %8 : vector<32x10xi32> to vector<32x10xf32>
    %10 = arith.truncf %9 : vector<32x10xf32> to vector<32x10xbf16>
    %c0_5 = arith.constant 0 : index
    %c0_6 = arith.constant 0 : index
    %11 = vector.load %arg3[%c0_5, %c0_6] : memref<10x128xbf16, #tpu.memory_space<vmem>>, vector<10x128xbf16>
    %cst_7 = arith.constant dense<0.000000e+00> : vector<32x128xf32>
    %12 = tpu.matmul %10, %11, %cst_7 {dimension_numbers = #tpu.dot_dimension_numbers<[1], [0], [0], [1], [0, 0, 1, 1], [], []>} : vector<32x10xbf16>, vector<10x128xbf16>, vector<32x128xf32> -> vector<32x128xf32>
    %13 = arith.addf %2, %12 : vector<32x128xf32>
    %14 = vector.extract_strided_slice %3 {offsets = [0, 1], sizes = [32, 1], strides = [1, 1]} : vector<32x2xi32> to vector<32x1xi32>
    %15 = tpu.iota {dimensions = array<i32: 1>} : vector<32x8xi32>
    %16 = vector.broadcast %14 : vector<32x1xi32> to vector<32x8xi32>
    %17 = arith.cmpi eq, %16, %15 : vector<32x8xi32>
    %18 = arith.extui %17 : vector<32x8xi1> to vector<32x8xi32>
    %19 = arith.sitofp %18 : vector<32x8xi32> to vector<32x8xf32>
    %20 = arith.truncf %19 : vector<32x8xf32> to vector<32x8xbf16>
    %c0_8 = arith.constant 0 : index
    %c0_9 = arith.constant 0 : index
    %21 = vector.load %arg4[%c0_8, %c0_9] : memref<8x128xbf16, #tpu.memory_space<vmem>>, vector<8x128xbf16>
    %cst_10 = arith.constant dense<0.000000e+00> : vector<32x128xf32>
    %22 = tpu.matmul %20, %21, %cst_10 {dimension_numbers = #tpu.dot_dimension_numbers<[1], [0], [0], [1], [0, 0, 1, 1], [], []>} : vector<32x8xbf16>, vector<8x128xbf16>, vector<32x128xf32> -> vector<32x128xf32>
    %23 = arith.addf %13, %22 : vector<32x128xf32>
    %c0_11 = arith.constant 0 : index
    %c0_12 = arith.constant 0 : index
    %24 = vector.load %arg6[%c0_11, %c0_12] : memref<1x128xf32, #tpu.memory_space<vmem>>, vector<1x128xf32>
    %25 = vector.broadcast %24 : vector<1x128xf32> to vector<32x128xf32>
    %26 = arith.addf %23, %25 : vector<32x128xf32>
    %cst_13 = arith.constant 0.000000e+00 : f32
    %27 = vector.broadcast %cst_13 : f32 to vector<32x128xf32>
    %28 = arith.maximumf %26, %27 : vector<32x128xf32>
    %c0_14 = arith.constant 0 : index
    %c0_15 = arith.constant 0 : index
    %29 = vector.load %arg7[%c0_14, %c0_15] : memref<128x128xbf16, #tpu.memory_space<vmem>>, vector<128x128xbf16>
    %c0_16 = arith.constant 0 : index
    %c0_17 = arith.constant 0 : index
    %30 = vector.load %arg8[%c0_16, %c0_17] : memref<1x128xf32, #tpu.memory_space<vmem>>, vector<1x128xf32>
    %31 = arith.truncf %28 : vector<32x128xf32> to vector<32x128xbf16>
    %cst_18 = arith.constant dense<0.000000e+00> : vector<32x128xf32>
    %32 = tpu.matmul %31, %29, %cst_18 {dimension_numbers = #tpu.dot_dimension_numbers<[1], [0], [0], [1], [0, 0, 1, 1], [], []>} : vector<32x128xbf16>, vector<128x128xbf16>, vector<32x128xf32> -> vector<32x128xf32>
    %33 = vector.broadcast %30 : vector<1x128xf32> to vector<32x128xf32>
    %34 = arith.addf %32, %33 : vector<32x128xf32>
    %cst_19 = arith.constant 0.000000e+00 : f32
    %35 = vector.broadcast %cst_19 : f32 to vector<32x128xf32>
    %36 = arith.maximumf %34, %35 : vector<32x128xf32>
    %c0_20 = arith.constant 0 : index
    %c0_21 = arith.constant 0 : index
    %37 = vector.load %arg9[%c0_20, %c0_21] : memref<128x2xbf16, #tpu.memory_space<vmem>>, vector<128x2xbf16>
    %c0_22 = arith.constant 0 : index
    %c0_23 = arith.constant 0 : index
    %38 = vector.load %arg10[%c0_22, %c0_23] : memref<1x2xf32, #tpu.memory_space<vmem>>, vector<1x2xf32>
    %39 = arith.truncf %36 : vector<32x128xf32> to vector<32x128xbf16>
    %cst_24 = arith.constant dense<0.000000e+00> : vector<32x2xf32>
    %40 = tpu.matmul %39, %37, %cst_24 {dimension_numbers = #tpu.dot_dimension_numbers<[1], [0], [0], [1], [0, 0, 1, 1], [], []>} : vector<32x128xbf16>, vector<128x2xbf16>, vector<32x2xf32> -> vector<32x2xf32>
    %41 = vector.broadcast %38 : vector<1x2xf32> to vector<32x2xf32>
    %42 = arith.addf %40, %41 : vector<32x2xf32>
    %c0_25 = arith.constant 0 : index
    %c0_26 = arith.constant 0 : index
    %43 = vector.load %arg11[%c0_25, %c0_26] : memref<32x2xf32, #tpu.memory_space<vmem>>, vector<32x2xf32>
    tpu.vector_store %arg11[%c0_25, %c0_26], %42 {strides = array<i32>} : memref<32x2xf32, #tpu.memory_space<vmem>>, vector<32x2xf32>,
    return
  }
  func.func @transform_0(%arg0: i32) -> (i32, i32) {
    %c0_i32 = arith.constant 0 : i32
    %c0_i32_0 = arith.constant 0 : i32
    return %arg0, %c0_i32 : i32, i32
  }
  func.func @transform_1(%arg0: i32) -> (i32, i32) {
    %c0_i32 = arith.constant 0 : i32
    %c0_i32_0 = arith.constant 0 : i32
    return %arg0, %c0_i32 : i32, i32
  }
  func.func @transform_2(%arg0: i32) -> (i32, i32) {
    %c0_i32 = arith.constant 0 : i32
    %c0_i32_0 = arith.constant 0 : i32
    %c0_i32_1 = arith.constant 0 : i32
    return %c0_i32, %c0_i32_0 : i32, i32
  }
  func.func @transform_3(%arg0: i32) -> (i32, i32) {
    %c0_i32 = arith.constant 0 : i32
    %c0_i32_0 = arith.constant 0 : i32
    %c0_i32_1 = arith.constant 0 : i32
    return %c0_i32, %c0_i32_0 : i32, i32
  }
  func.func @transform_4(%arg0: i32) -> (i32, i32) {
    %c0_i32 = arith.constant 0 : i32
    %c0_i32_0 = arith.constant 0 : i32
    %c0_i32_1 = arith.constant 0 : i32
    return %c0_i32, %c0_i32_0 : i32, i32
  }
  func.func @transform_5(%arg0: i32) -> (i32, i32) {
    %c0_i32 = arith.constant 0 : i32
    %c0_i32_0 = arith.constant 0 : i32
    %c0_i32_1 = arith.constant 0 : i32
    return %c0_i32, %c0_i32_0 : i32, i32
  }
  func.func @transform_6(%arg0: i32) -> (i32, i32) {
    %c0_i32 = arith.constant 0 : i32
    %c0_i32_0 = arith.constant 0 : i32
    %c0_i32_1 = arith.constant 0 : i32
    return %c0_i32, %c0_i32_0 : i32, i32
  }
  func.func @transform_7(%arg0: i32) -> (i32, i32) {
    %c0_i32 = arith.constant 0 : i32
    %c0_i32_0 = arith.constant 0 : i32
    %c0_i32_1 = arith.constant 0 : i32
    return %c0_i32, %c0_i32_0 : i32, i32
  }
  func.func @transform_8(%arg0: i32) -> (i32, i32) {
    %c0_i32 = arith.constant 0 : i32
    %c0_i32_0 = arith.constant 0 : i32
    %c0_i32_1 = arith.constant 0 : i32
    return %c0_i32, %c0_i32_0 : i32, i32
  }
  func.func @transform_9(%arg0: i32) -> (i32, i32) {
    %c0_i32 = arith.constant 0 : i32
    %c0_i32_0 = arith.constant 0 : i32
    %c0_i32_1 = arith.constant 0 : i32
    return %c0_i32, %c0_i32_0 : i32, i32
  }
  func.func @transform_10(%arg0: i32) -> (i32, i32) {
    %c0_i32 = arith.constant 0 : i32
    %c0_i32_0 = arith.constant 0 : i32
    return %arg0, %c0_i32 : i32, i32
  }
}

</mosaic_0001>

<llo_original>
// kernel: tpu_custom_call.1
$region0: #{tpu_custom_call.1}
  #allocation0 [shape = 'u32[]', space=smem, size = 0x4, offset = 0x4, fixed_abs, tag = 'smem constant byte address 0x4 - core index']
  #allocation1 [shape = 'u32[144,128]{1,0:T(1,128)}', space=vmem, size = 0x12000, scoped, tag = 'internal scratch']
  %s0 = inlined_call_operand.vmem [shape: s32[64,2], index: 0, kind: input, shape index: {}]
  %s1 = inlined_call_operand.vmem [shape: bf16[64,5], index: 1, kind: input, shape index: {}]
  %s2 = inlined_call_operand.vmem [shape: bf16[10,128], index: 2, kind: input, shape index: {}]
  %s3 = inlined_call_operand.vmem [shape: bf16[8,128], index: 3, kind: input, shape index: {}]
  %s4 = inlined_call_operand.vmem [shape: bf16[5,128], index: 4, kind: input, shape index: {}]
  %s5 = inlined_call_operand.vmem [shape: f32[1,128], index: 5, kind: input, shape index: {}]
  %s6 = inlined_call_operand.vmem [shape: bf16[128,128], index: 6, kind: input, shape index: {}]
  %s7 = inlined_call_operand.vmem [shape: f32[1,128], index: 7, kind: input, shape index: {}]
  %s8 = inlined_call_operand.vmem [shape: bf16[128,2], index: 8, kind: input, shape index: {}]
  %s9 = inlined_call_operand.vmem [shape: f32[1,2], index: 9, kind: input, shape index: {}]
  %s10 = inlined_call_operand.vmem [shape: f32[64,2], index: 10, kind: output, shape index: {}]
  %s11 = sld [smem:[#allocation0]]
  $region73: #{tpu_custom_call.1} parent=0
    _
  %s13 = ssub.s32 1, %s11
  %s14 = scalar_select 0, %s13, %s11
  loop: start=0, step=1, limit=4
  $region2: #{tpu_custom_call.1} parent=0 // loop_pre_header
    _
  $region3: #{tpu_custom_call.1} parent=0 // loop_header
    %s16 = sphi 0, %s20
    %p17 = scmp.ge.s32.totalorder %s16, 4
    %s26 = sphi 0, %s28
    %s29 = sphi 0, %s26
    %s30 = sphi 0, %s29
    %s46 = sphi 0, %s30
    %s52 = sphi 0, %s54
    %s55 = sphi 0, %s52
    %s56 = sphi 0, %s55
    %s72 = sphi 0, %s56
    %s76 = sphi 0, %s76
    %s78 = sphi 0, %s76
    %s79 = sphi 0, %s78
    %s93 = sphi 0, %s79
    %s97 = sphi 0, %s97
    %s99 = sphi 0, %s97
    %s100 = sphi 0, %s99
    %s114 = sphi 0, %s100
    %s118 = sphi 0, %s118
    %s120 = sphi 0, %s118
    %s121 = sphi 0, %s120
    %s135 = sphi 0, %s121
    %s139 = sphi 0, %s139
    %s141 = sphi 0, %s139
    %s142 = sphi 0, %s141
    %s156 = sphi 0, %s142
    %s160 = sphi 0, %s160
    %s162 = sphi 0, %s160
    %s163 = sphi 0, %s162
    %s177 = sphi 0, %s163
    %s181 = sphi 0, %s181
    %s183 = sphi 0, %s181
    %s184 = sphi 0, %s183
    %s198 = sphi 0, %s184
    %s202 = sphi 0, %s202
    %s204 = sphi 0, %s202
    %s205 = sphi 0, %s204
    %s219 = sphi 0, %s205
    %s223 = sphi 0, %s223
    %s225 = sphi 0, %s223
    %s226 = sphi 0, %s225
    %s240 = sphi 0, %s226
    %s246 = sphi 0, %s248
    %s249 = sphi 0, %s246
    %s250 = sphi 0, %s249
    %s266 = sphi 0, %s250
  $region4: #{tpu_custom_call.1} parent=0 // loop_header_branch
    %19 = sbr.rel (%p17) target = $region8
  $region5: #{tpu_custom_call.1} parent=0 // loop_body
    %s21 = ssub.s32 %s16, 1
    %s22 = ssub.s32 %s16, 2
    %s23 = sadd.s32 %s16, 1
    %s24 = ssub.s32 %s16, %s23
    %p25 = scmp.eq.s32.totalorder %s24, 0
    %s27 = sadd.s32 %s26, 1
    %s28 = scalar_select %p25, %s26, %s27
    %p31 = pneg %p25
    %p32 = scmp.eq.s32.totalorder %s16, 1
    %p33 = por %p31, %p32
    %p34 = scmp.ne.s32.totalorder %s26, %s29
    %p35 = scmp.eq.s32.totalorder %s16, 0
    %p36 = por %p34, %p35
    %p37 = scmp.ne.s32.totalorder %s26, %s29
    %p38 = scmp.eq.s32.totalorder %s21, 1
    %p39 = por %p37, %p38
    %p40 = scmp.ne.s32.totalorder %s29, %s30
    %p41 = scmp.eq.s32.totalorder %s21, 0
    %p42 = por %p40, %p41
    %p43 = scmp.ne.s32.totalorder %s29, %s30
    %p44 = scmp.eq.s32.totalorder %s22, 1
    %p45 = por %p43, %p44
    %p47 = scmp.ne.s32.totalorder %s30, %s46
    %p48 = scmp.eq.s32.totalorder %s22, 0
    %p49 = por %p47, %p48
    %s50 = ssub.s32 %s16, %s23
    %p51 = scmp.eq.s32.totalorder %s50, 0
    %s53 = sadd.s32 %s52, 1
    %s54 = scalar_select %p51, %s52, %s53
    %p57 = pneg %p51
    %p58 = scmp.eq.s32.totalorder %s16, 1
    %p59 = por %p57, %p58
    %p60 = scmp.ne.s32.totalorder %s52, %s55
    %p61 = scmp.eq.s32.totalorder %s16, 0
    %p62 = por %p60, %p61
    %p63 = scmp.ne.s32.totalorder %s52, %s55
    %p64 = scmp.eq.s32.totalorder %s21, 1
    %p65 = por %p63, %p64
    %p66 = scmp.ne.s32.totalorder %s55, %s56
    %p67 = scmp.eq.s32.totalorder %s21, 0
    %p68 = por %p66, %p67
    %p69 = scmp.ne.s32.totalorder %s55, %s56
    %p70 = scmp.eq.s32.totalorder %s22, 1
    %p71 = por %p69, %p70
    %p73 = scmp.ne.s32.totalorder %s56, %s72
    %p74 = scmp.eq.s32.totalorder %s22, 0
    %p75 = por %p73, %p74
    %s77 = sadd.s32 %s76, 1
    %p80 = scmp.eq.s32.totalorder %s16, 1
    %p81 = scmp.ne.s32.totalorder %s76, %s78
    %p82 = scmp.eq.s32.totalorder %s16, 0
    %p83 = por %p81, %p82
    %p84 = scmp.ne.s32.totalorder %s76, %s78
    %p85 = scmp.eq.s32.totalorder %s21, 1
    %p86 = por %p84, %p85
    %p87 = scmp.ne.s32.totalorder %s78, %s79
    %p88 = scmp.eq.s32.totalorder %s21, 0
    %p89 = por %p87, %p88
    %p90 = scmp.ne.s32.totalorder %s78, %s79
    %p91 = scmp.eq.s32.totalorder %s22, 1
    %p92 = por %p90, %p91
    %p94 = scmp.ne.s32.totalorder %s79, %s93
    %p95 = scmp.eq.s32.totalorder %s22, 0
    %p96 = por %p94, %p95
    %s98 = sadd.s32 %s97, 1
    %p101 = scmp.eq.s32.totalorder %s16, 1
    %p102 = scmp.ne.s32.totalorder %s97, %s99
    %p103 = scmp.eq.s32.totalorder %s16, 0
    %p104 = por %p102, %p103
    %p105 = scmp.ne.s32.totalorder %s97, %s99
    %p106 = scmp.eq.s32.totalorder %s21, 1
    %p107 = por %p105, %p106
    %p108 = scmp.ne.s32.totalorder %s99, %s100
    %p109 = scmp.eq.s32.totalorder %s21, 0
    %p110 = por %p108, %p109
    %p111 = scmp.ne.s32.totalorder %s99, %s100
    %p112 = scmp.eq.s32.totalorder %s22, 1
    %p113 = por %p111, %p112
    %p115 = scmp.ne.s32.totalorder %s100, %s114
    %p116 = scmp.eq.s32.totalorder %s22, 0
    %p117 = por %p115, %p116
    %s119 = sadd.s32 %s118, 1
    %p122 = scmp.eq.s32.totalorder %s16, 1
    %p123 = scmp.ne.s32.totalorder %s118, %s120
    %p124 = scmp.eq.s32.totalorder %s16, 0
    %p125 = por %p123, %p124
    %p126 = scmp.ne.s32.totalorder %s118, %s120
    %p127 = scmp.eq.s32.totalorder %s21, 1
    %p128 = por %p126, %p127
    %p129 = scmp.ne.s32.totalorder %s120, %s121
    %p130 = scmp.eq.s32.totalorder %s21, 0
    %p131 = por %p129, %p130
    %p132 = scmp.ne.s32.totalorder %s120, %s121
    %p133 = scmp.eq.s32.totalorder %s22, 1
    %p134 = por %p132, %p133
    %p136 = scmp.ne.s32.totalorder %s121, %s135
    %p137 = scmp.eq.s32.totalorder %s22, 0
    %p138 = por %p136, %p137
    %s140 = sadd.s32 %s139, 1
    %p143 = scmp.eq.s32.totalorder %s16, 1
    %p144 = scmp.ne.s32.totalorder %s139, %s141
    %p145 = scmp.eq.s32.totalorder %s16, 0
    %p146 = por %p144, %p145
    %p147 = scmp.ne.s32.totalorder %s139, %s141
    %p148 = scmp.eq.s32.totalorder %s21, 1
    %p149 = por %p147, %p148
    %p150 = scmp.ne.s32.totalorder %s141, %s142
    %p151 = scmp.eq.s32.totalorder %s21, 0
    %p152 = por %p150, %p151
    %p153 = scmp.ne.s32.totalorder %s141, %s142
    %p154 = scmp.eq.s32.totalorder %s22, 1
    %p155 = por %p153, %p154
    %p157 = scmp.ne.s32.totalorder %s142, %s156
    %p158 = scmp.eq.s32.totalorder %s22, 0
    %p159 = por %p157, %p158
    %s161 = sadd.s32 %s160, 1
    %p164 = scmp.eq.s32.totalorder %s16, 1
    %p165 = scmp.ne.s32.totalorder %s160, %s162
    %p166 = scmp.eq.s32.totalorder %s16, 0
    %p167 = por %p165, %p166
    %p168 = scmp.ne.s32.totalorder %s160, %s162
    %p169 = scmp.eq.s32.totalorder %s21, 1
    %p170 = por %p168, %p169
    %p171 = scmp.ne.s32.totalorder %s162, %s163
    %p172 = scmp.eq.s32.totalorder %s21, 0
    %p173 = por %p171, %p172
    %p174 = scmp.ne.s32.totalorder %s162, %s163
    %p175 = scmp.eq.s32.totalorder %s22, 1
    %p176 = por %p174, %p175
    %p178 = scmp.ne.s32.totalorder %s163, %s177
    %p179 = scmp.eq.s32.totalorder %s22, 0
    %p180 = por %p178, %p179
    %s182 = sadd.s32 %s181, 1
    %p185 = scmp.eq.s32.totalorder %s16, 1
    %p186 = scmp.ne.s32.totalorder %s181, %s183
    %p187 = scmp.eq.s32.totalorder %s16, 0
    %p188 = por %p186, %p187
    %p189 = scmp.ne.s32.totalorder %s181, %s183
    %p190 = scmp.eq.s32.totalorder %s21, 1
    %p191 = por %p189, %p190
    %p192 = scmp.ne.s32.totalorder %s183, %s184
    %p193 = scmp.eq.s32.totalorder %s21, 0
    %p194 = por %p192, %p193
    %p195 = scmp.ne.s32.totalorder %s183, %s184
    %p196 = scmp.eq.s32.totalorder %s22, 1
    %p197 = por %p195, %p196
    %p199 = scmp.ne.s32.totalorder %s184, %s198
    %p200 = scmp.eq.s32.totalorder %s22, 0
    %p201 = por %p199, %p200
    %s203 = sadd.s32 %s202, 1
    %p206 = scmp.eq.s32.totalorder %s16, 1
    %p207 = scmp.ne.s32.totalorder %s202, %s204
    %p208 = scmp.eq.s32.totalorder %s16, 0
    %p209 = por %p207, %p208
    %p210 = scmp.ne.s32.totalorder %s202, %s204
    %p211 = scmp.eq.s32.totalorder %s21, 1
    %p212 = por %p210, %p211
    %p213 = scmp.ne.s32.totalorder %s204, %s205
    %p214 = scmp.eq.s32.totalorder %s21, 0
    %p215 = por %p213, %p214
    %p216 = scmp.ne.s32.totalorder %s204, %s205
    %p217 = scmp.eq.s32.totalorder %s22, 1
    %p218 = por %p216, %p217
    %p220 = scmp.ne.s32.totalorder %s205, %s219
    %p221 = scmp.eq.s32.totalorder %s22, 0
    %p222 = por %p220, %p221
    %s224 = sadd.s32 %s223, 1
    %p227 = scmp.eq.s32.totalorder %s16, 1
    %p228 = scmp.ne.s32.totalorder %s223, %s225
    %p229 = scmp.eq.s32.totalorder %s16, 0
    %p230 = por %p228, %p229
    %p231 = scmp.ne.s32.totalorder %s223, %s225
    %p232 = scmp.eq.s32.totalorder %s21, 1
    %p233 = por %p231, %p232
    %p234 = scmp.ne.s32.totalorder %s225, %s226
    %p235 = scmp.eq.s32.totalorder %s21, 0
    %p236 = por %p234, %p235
    %p237 = scmp.ne.s32.totalorder %s225, %s226
    %p238 = scmp.eq.s32.totalorder %s22, 1
    %p239 = por %p237, %p238
    %p241 = scmp.ne.s32.totalorder %s226, %s240
    %p242 = scmp.eq.s32.totalorder %s22, 0
    %p243 = por %p241, %p242
    %s244 = ssub.s32 %s16, %s23
    %p245 = scmp.eq.s32.totalorder %s244, 0
    %s247 = sadd.s32 %s246, 1
    %s248 = scalar_select %p245, %s246, %s247
    %p251 = pneg %p245
    %p252 = scmp.eq.s32.totalorder %s16, 1
    %p253 = por %p251, %p252
    %p254 = scmp.ne.s32.totalorder %s246, %s249
    %p255 = scmp.eq.s32.totalorder %s16, 0
    %p256 = por %p254, %p255
    %p257 = scmp.ne.s32.totalorder %s246, %s249
    %p258 = scmp.eq.s32.totalorder %s21, 1
    %p259 = por %p257, %p258
    %p260 = scmp.ne.s32.totalorder %s249, %s250
    %p261 = scmp.eq.s32.totalorder %s21, 0
    %p262 = por %p260, %p261
    %p263 = scmp.ne.s32.totalorder %s249, %s250
    %p264 = scmp.eq.s32.totalorder %s22, 1
    %p265 = por %p263, %p264
    %p267 = scmp.ne.s32.totalorder %s250, %s266
    %p268 = scmp.eq.s32.totalorder %s22, 0
    %p269 = por %p267, %p268
    %p270 = scmp.le.s32.totalorder 1, %s16
    %p271 = scmp.lt.s32.totalorder %s16, 3
    %p272 = pnand %p270, %p271
    %p273 = pneg %p272
    // Predicated region
    $region9: #{tpu_custom_call.1} parent=5 // pred_check
      _
    $region10: #{tpu_custom_call.1} parent=5 // pred_check_branch
      %275 = sbr.rel (%p272) target = $region12
    $region11: #{tpu_custom_call.1} parent=5 // pred_region
      %s276 = ssub.s32 %s16, 1
      // Predicated region
      $region13: #{tpu_custom_call.1} parent=11 // pred_check
        %p277 = pneg %p89
      $region14: #{tpu_custom_call.1} parent=11 // pred_check_branch
        %279 = sbr.rel (%p277) target = $region16
      $region15: #{tpu_custom_call.1} parent=11 // pred_region
        _
      $region16: #{tpu_custom_call.1} parent=11 // pred_fallthru
        _
      // Predicated region
      $region17: #{tpu_custom_call.1} parent=11 // pred_check
        %p280 = pneg %p110
      $region18: #{tpu_custom_call.1} parent=11 // pred_check_branch
        %282 = sbr.rel (%p280) target = $region20
      $region19: #{tpu_custom_call.1} parent=11 // pred_region
        _
      $region20: #{tpu_custom_call.1} parent=11 // pred_fallthru
        _
      // Predicated region
      $region21: #{tpu_custom_call.1} parent=11 // pred_check
        %p283 = pneg %p131
      $region22: #{tpu_custom_call.1} parent=11 // pred_check_branch
        %285 = sbr.rel (%p283) target = $region24
      $region23: #{tpu_custom_call.1} parent=11 // pred_region
        _
      $region24: #{tpu_custom_call.1} parent=11 // pred_fallthru
        _
      // Predicated region
      $region25: #{tpu_custom_call.1} parent=11 // pred_check
        %p286 = pneg %p152
      $region26: #{tpu_custom_call.1} parent=11 // pred_check_branch
        %288 = sbr.rel (%p286) target = $region28
      $region27: #{tpu_custom_call.1} parent=11 // pred_region
        _
      $region28: #{tpu_custom_call.1} parent=11 // pred_fallthru
        _
      // Predicated region
      $region29: #{tpu_custom_call.1} parent=11 // pred_check
        %p289 = pneg %p173
      $region30: #{tpu_custom_call.1} parent=11 // pred_check_branch
        %291 = sbr.rel (%p289) target = $region32
      $region31: #{tpu_custom_call.1} parent=11 // pred_region
        _
      $region32: #{tpu_custom_call.1} parent=11 // pred_fallthru
        _
      // Predicated region
      $region33: #{tpu_custom_call.1} parent=11 // pred_check
        %p292 = pneg %p194
      $region34: #{tpu_custom_call.1} parent=11 // pred_check_branch
        %294 = sbr.rel (%p292) target = $region36
      $region35: #{tpu_custom_call.1} parent=11 // pred_region
        _
      $region36: #{tpu_custom_call.1} parent=11 // pred_fallthru
        _
      // Predicated region
      $region37: #{tpu_custom_call.1} parent=11 // pred_check
        %p295 = pneg %p215
      $region38: #{tpu_custom_call.1} parent=11 // pred_check_branch
        %297 = sbr.rel (%p295) target = $region40
      $region39: #{tpu_custom_call.1} parent=11 // pred_region
        _
      $region40: #{tpu_custom_call.1} parent=11 // pred_fallthru
        _
      // Predicated region
      $region41: #{tpu_custom_call.1} parent=11 // pred_check
        %p298 = pneg %p236
      $region42: #{tpu_custom_call.1} parent=11 // pred_check_branch
        %300 = sbr.rel (%p298) target = $region44
      $region43: #{tpu_custom_call.1} parent=11 // pred_region
        _
      $region44: #{tpu_custom_call.1} parent=11 // pred_fallthru
        _
    $region12: #{tpu_custom_call.1} parent=5 // pred_fallthru
      _
    %p301 = scmp.lt.s32.totalorder %s16, 2
    // Predicated region
    $region45: #{tpu_custom_call.1} parent=5 // pred_check
      %p302 = pneg %p301
    $region46: #{tpu_custom_call.1} parent=5 // pred_check_branch
      %304 = sbr.rel (%p302) target = $region48
    $region47: #{tpu_custom_call.1} parent=5 // pred_region
      // Predicated region
      $region49: #{tpu_custom_call.1} parent=47 // pred_check
        %p305 = pneg %p36
      $region50: #{tpu_custom_call.1} parent=47 // pred_check_branch
        %307 = sbr.rel (%p305) target = $region52
      $region51: #{tpu_custom_call.1} parent=47 // pred_region
        %s308 = smul.u32 4, %s16
        %p309 = scmp.lt.s32.totalorder %s308, 7
        %s310 = scalar_select %p309, %s308, 7
        %s311 = smul.addr %s310, 8
        %s312 = scalar_lea.vmem %s0, %s311
        %s313 = smul.u32 4, %s16
      $region52: #{tpu_custom_call.1} parent=47 // pred_fallthru
        _
      // Predicated region
      $region53: #{tpu_custom_call.1} parent=47 // pred_check
        %p314 = pneg %p62
      $region54: #{tpu_custom_call.1} parent=47 // pred_check_branch
        %316 = sbr.rel (%p314) target = $region56
      $region55: #{tpu_custom_call.1} parent=47 // pred_region
        %s317 = smul.u32 4, %s16
        %p318 = scmp.lt.s32.totalorder %s317, 7
        %s319 = scalar_select %p318, %s317, 7
        %s320 = smul.addr %s319, 4
        %s321 = scalar_lea.vmem %s1, %s320
        %s322 = smul.u32 4, %s16
      $region56: #{tpu_custom_call.1} parent=47 // pred_fallthru
        _
    $region48: #{tpu_custom_call.1} parent=5 // pred_fallthru
      _
    %p323 = scmp.le.s32.totalorder 1, %s16
    %p324 = scmp.lt.s32.totalorder %s16, 3
    %p325 = pnand %p323, %p324
    %p326 = pneg %p325
    // Predicated region
    $region57: #{tpu_custom_call.1} parent=5 // pred_check
      _
    $region58: #{tpu_custom_call.1} parent=5 // pred_check_branch
      %328 = sbr.rel (%p325) target = $region60
    $region59: #{tpu_custom_call.1} parent=5 // pred_region
      %s329 = ssub.s32 %s16, 1
      %s330 = smul.u32 4, %s21
      %p331 = scmp.lt.s32.totalorder %s330, 7
      %s332 = scalar_select %p331, %s330, 7
      %s333 = smul.addr %s332, 8
      %s334 = scalar_lea.vmem %s0, %s333
      %p335 = pneg %p42
      %p336 = pneg %p39
      %s337 = smul.u32 4, %s21
      %p338 = scmp.lt.s32.totalorder %s337, 7
      %s339 = scalar_select %p338, %s337, 7
      %s340 = smul.addr %s339, 4
      %s341 = scalar_lea.vmem %s1, %s340
      %p342 = pneg %p68
      %p343 = pneg %p65
      %p344 = pneg %p89
      %p345 = pneg %p86
      %p346 = pneg %p110
      %p347 = pneg %p107
      %p348 = pneg %p131
      %p349 = pneg %p128
      %p350 = pneg %p152
      %p351 = pneg %p149
      %p352 = pneg %p173
      %p353 = pneg %p170
      %p354 = pneg %p194
      %p355 = pneg %p191
      %p356 = pneg %p215
      %p357 = pneg %p212
      %p358 = pneg %p236
      %p359 = pneg %p233
      %p360 = pneg %p262
      %p361 = pneg %p259
      %s362 = smul.u32 4, %s21
      %p363 = scmp.lt.s32.totalorder %s362, 7
      %s364 = scalar_select %p363, %s362, 7
      %s365 = smul.addr %s364, 8
      %s366 = scalar_lea.vmem %s10, %s365
      %s367 = smul.u32 4, %s21
      %p368 = scmp.lt.s32.totalorder %s367, 7
      %s369 = scalar_select %p368, %s367, 7
      %s370 = smul.addr %s369, 8
      %s371 = scalar_lea.vmem %s0, %s370
      %s372 = smul.u32 4, %s21
      %s373 = smul.u32 4, %s21
      %p374 = scmp.lt.s32.totalorder %s373, 7
      %s375 = scalar_select %p374, %s373, 7
      %s376 = smul.addr %s375, 4
      %s377 = scalar_lea.vmem %s1, %s376
      %s378 = smul.u32 4, %s21
      %s379 = smul.u32 4, %s21
      %p380 = scmp.lt.s32.totalorder %s379, 7
      %s381 = scalar_select %p380, %s379, 7
      %s382 = smul.addr %s381, 8
      %s383 = scalar_lea.vmem %s10, %s382
      %s384 = smul.u32 4, %s21
      %v386 = vld [vmem:[%s377] sm:$0xf]
      %v387 = vld [vmem:[%s377 + $0x4] sm:$0xf]
      %v388 = vld [vmem:[%s377 + $0x8] sm:$0xf]
      %v389 = vld [vmem:[%s377 + $0xc] sm:$0xf]
      %v390 = vld [vmem:[%s4] sm:$0x7]
      %v391 = vld [vmem:[%s371] sm:$0xff]
      %v392 = vld [vmem:[%s371 + $0x8] sm:$0xff]
      %v393 = vld [vmem:[%s371 + $0x10] sm:$0xff]
      %v394 = vld [vmem:[%s371 + $0x18] sm:$0xff]
      %v395 = vlaneseq
      %v396 = vand.u32 %v395, 127
      %397 = vset.pattern.permute.xlu0 0
      %398 = vperm.xlu0 %397, %v391
      %v399 = vpop.permute.xlu0 %398
      %400 = vset.pattern.permute.xlu0 0
      %401 = vperm.xlu0 %400, %v392
      %v402 = vpop.permute.xlu0 %401
      %403 = vset.pattern.permute.xlu0 0
      %404 = vperm.xlu0 %403, %v393
      %v405 = vpop.permute.xlu0 %404
      %406 = vset.pattern.permute.xlu0 0
      %407 = vperm.xlu0 %406, %v394
      %v408 = vpop.permute.xlu0 %407
      %vm409 = vcmp.eq.s32.totalorder %v399, %v396
      %vm410 = vcmp.eq.s32.totalorder %v402, %v396
      %vm411 = vcmp.eq.s32.totalorder %v405, %v396
      %vm412 = vcmp.eq.s32.totalorder %v408, %v396
      %v413 = vsel %vm409, 1, 0
      %v414 = vsel %vm410, 1, 0
      %v415 = vsel %vm411, 1, 0
      %v416 = vsel %vm412, 1, 0
      %v417 = vcvt.s32.f32 %v413
      %v418 = vcvt.s32.f32 %v414
      %v419 = vcvt.s32.f32 %v415
      %v420 = vcvt.s32.f32 %v416
      %v421 = vpack.c.bf16 %v418, %v417
      %v422 = vpack.c.bf16 %v420, %v419
      %v423 = vld [vmem:[%s2] sm:$0xf]
      %v424 = vld [vmem:[%s2 + $0x4] sm:$0x1]
      %v427 = vunpack.c.l.b16 %v423
      %v428 = vunpack.c.l.b16 %v424
      %v429 = vpack.c.b16 %v428, %v427
      %vm430 = vcmask 80896
      %v432 = vsel %vm430, %v421, 0
      %v435 = vsel %vm430, %v422, 0
      %vm437 = vcmask 1044480
      %v439 = vsel %vm437, %v429, 0
      %441 = vmatprep.subr.bf16.mxu0 0
      %442 = vmatpush1.bf16.msra.mxu0 0
      %443 = vmatprep.subr.bf16.mxu0 0
      %444 = vmatpush1.bf16.msra.mxu0 0
      %445 = vmatprep.subr.bf16.mxu0 0
      %446 = vmatpush1.bf16.msra.mxu0 0
      %447 = vmatprep.subr.bf16.mxu0 0
      %448 = vmatpush1.bf16.msra.mxu0 0
      %449 = vmatprep.subr.bf16.mxu0 0
      %450 = vmatpush1.bf16.msra.mxu0 0
      %451 = vmatprep.subr.bf16.mxu0 0
      %452 = vmatpush1.bf16.msra.mxu0 0
      %453 = vmatprep.subr.bf16.mxu0 0
      %454 = vmatpush1.bf16.msra.mxu0 0
      %455 = vmatprep.subr.bf16.mxu0 0
      %456 = vmatpush1.bf16.msra.mxu0 %v439
      %457 = vmatprep.subr.bf16.mxu0 0
      %458 = vmatpush2.bf16.msra.mxu0 0
      %459 = vmatprep.subr.bf16.mxu0 0
      %460 = vmatpush2.bf16.msra.mxu0 0
      %461 = vmatprep.subr.bf16.mxu0 0
      %462 = vmatpush2.bf16.msra.mxu0 0
      %463 = vmatprep.subr.bf16.mxu0 0
      %464 = vmatpush2.bf16.msra.mxu0 0
      %465 = vmatprep.subr.bf16.mxu0 0
      %466 = vmatpush2.bf16.msra.mxu0 0
      %467 = vmatprep.subr.bf16.mxu0 0
      %468 = vmatpush2.bf16.msra.mxu0 0
      %469 = vmatprep.subr.bf16.mxu0 0
      %470 = vmatpush2.bf16.msra.mxu0 0
      %471 = vmatprep.subr.bf16.mxu0 0
      %472 = vmatpush2.bf16.msra.mxu0 0
      %473 = vmatprep.mubr.bf16.mxu0 0
      %474 = vmatmul.mubr.bf16.gmra.mxu0 %v432
      %v475 = vpop.f32.mrf.mxu0
      %v476 = vadd.f32 0.0, %v475
      %v477 = vpop.f32.mrf.mxu0
      %v478 = vpop.f32.mrf.mxu0
      %v479 = vadd.f32 0.0, %v478
      %v480 = vpop.f32.mrf.mxu0
      %481 = vmatprep.mubr.bf16.mxu0 0
      %482 = vmatmul.mubr.bf16.gmra.mxu0 %v435
      %v483 = vpop.f32.mrf.mxu0
      %v484 = vadd.f32 0.0, %v483
      %v485 = vpop.f32.mrf.mxu0
      %v486 = vpop.f32.mrf.mxu0
      %v487 = vadd.f32 0.0, %v486
      %v488 = vpop.f32.mrf.mxu0
      %489 = vdwg.mxu0
      %v494 = vunpack.c.l.b16 %v386
      %v495 = vunpack.c.l.b16 %v387
      %v496 = vunpack.c.l.b16 %v388
      %v497 = vunpack.c.l.b16 %v389
      %v498 = vpack.c.b16 %v495, %v494
      %v499 = vpack.c.b16 %v497, %v496
      %vm500 = vcmask 39936
      %v502 = vsel %vm500, %v498, 0
      %v505 = vsel %vm500, %v499, 0
      %vm507 = vcmask 1041408
      %vm508 = vcmask 1042432
      %v509 = vsel %vm507, 4294967295, 65535
      %v510 = vsel %vm508, %v509, 0
      %v512 = vand.u32 %v390, %v510
      %514 = vmatprep.subr.bf16.mxu0 0
      %515 = vmatpush1.bf16.msra.mxu0 0
      %516 = vmatprep.subr.bf16.mxu0 0
      %517 = vmatpush1.bf16.msra.mxu0 0
      %518 = vmatprep.subr.bf16.mxu0 0
      %519 = vmatpush1.bf16.msra.mxu0 0
      %520 = vmatprep.subr.bf16.mxu0 0
      %521 = vmatpush1.bf16.msra.mxu0 0
      %522 = vmatprep.subr.bf16.mxu0 0
      %523 = vmatpush1.bf16.msra.mxu0 0
      %524 = vmatprep.subr.bf16.mxu0 0
      %525 = vmatpush1.bf16.msra.mxu0 0
      %526 = vmatprep.subr.bf16.mxu0 0
      %527 = vmatpush1.bf16.msra.mxu0 0
      %528 = vmatprep.subr.bf16.mxu0 0
      %529 = vmatpush1.bf16.msra.mxu0 %v512
      %530 = vmatprep.subr.bf16.mxu0 0
      %531 = vmatpush2.bf16.msra.mxu0 0
      %532 = vmatprep.subr.bf16.mxu0 0
      %533 = vmatpush2.bf16.msra.mxu0 0
      %534 = vmatprep.subr.bf16.mxu0 0
      %535 = vmatpush2.bf16.msra.mxu0 0
      %536 = vmatprep.subr.bf16.mxu0 0
      %537 = vmatpush2.bf16.msra.mxu0 0
      %538 = vmatprep.subr.bf16.mxu0 0
      %539 = vmatpush2.bf16.msra.mxu0 0
      %540 = vmatprep.subr.bf16.mxu0 0
      %541 = vmatpush2.bf16.msra.mxu0 0
      %542 = vmatprep.subr.bf16.mxu0 0
      %543 = vmatpush2.bf16.msra.mxu0 0
      %544 = vmatprep.subr.bf16.mxu0 0
      %545 = vmatpush2.bf16.msra.mxu0 0
      %546 = vmatprep.mubr.bf16.mxu0 0
      %547 = vmatmul.mubr.bf16.gmra.mxu0 %v502
      %v548 = vpop.f32.mrf.mxu0
      %v549 = vadd.f32 %v476, %v548
      %v550 = vpop.f32.mrf.mxu0
      %v551 = vpop.f32.mrf.mxu0
      %v552 = vadd.f32 %v479, %v551
      %v553 = vpop.f32.mrf.mxu0
      %554 = vmatprep.mubr.bf16.mxu0 0
      %555 = vmatmul.mubr.bf16.gmra.mxu0 %v505
      %v556 = vpop.f32.mrf.mxu0
      %v557 = vadd.f32 %v484, %v556
      %v558 = vpop.f32.mrf.mxu0
      %v559 = vpop.f32.mrf.mxu0
      %v560 = vadd.f32 %v487, %v559
      %v561 = vpop.f32.mrf.mxu0
      %562 = vdwg.mxu0
      %563 = vset.pattern.permute.xlu0 1
      %564 = vperm.xlu0 %563, %v391
      %v565 = vpop.permute.xlu0 %564
      %566 = vset.pattern.permute.xlu0 1
      %567 = vperm.xlu0 %566, %v392
      %v568 = vpop.permute.xlu0 %567
      %569 = vset.pattern.permute.xlu0 1
      %570 = vperm.xlu0 %569, %v393
      %v571 = vpop.permute.xlu0 %570
      %572 = vset.pattern.permute.xlu0 1
      %573 = vperm.xlu0 %572, %v394
      %v574 = vpop.permute.xlu0 %573
      %vm575 = vcmp.eq.s32.totalorder %v565, %v396
      %vm576 = vcmp.eq.s32.totalorder %v568, %v396
      %vm577 = vcmp.eq.s32.totalorder %v571, %v396
      %vm578 = vcmp.eq.s32.totalorder %v574, %v396
      %v579 = vsel %vm575, 1, 0
      %v580 = vsel %vm576, 1, 0
      %v581 = vsel %vm577, 1, 0
      %v582 = vsel %vm578, 1, 0
      %v583 = vcvt.s32.f32 %v579
      %v584 = vcvt.s32.f32 %v580
      %v585 = vcvt.s32.f32 %v581
      %v586 = vcvt.s32.f32 %v582
      %v587 = vpack.c.bf16 %v584, %v583
      %v588 = vpack.c.bf16 %v586, %v585
      %v589 = vld [vmem:[%s3] sm:$0xf]
      %vm590 = vcmask 64512
      %v592 = vsel %vm590, %v587, 0
      %v595 = vsel %vm590, %v588, 0
      %vm597 = vcmask 1043456
      %v599 = vsel %vm597, %v589, 0
      %601 = vmatprep.subr.bf16.mxu0 0
      %602 = vmatpush1.bf16.msra.mxu0 0
      %603 = vmatprep.subr.bf16.mxu0 0
      %604 = vmatpush1.bf16.msra.mxu0 0
      %605 = vmatprep.subr.bf16.mxu0 0
      %606 = vmatpush1.bf16.msra.mxu0 0
      %607 = vmatprep.subr.bf16.mxu0 0
      %608 = vmatpush1.bf16.msra.mxu0 0
      %609 = vmatprep.subr.bf16.mxu0 0
      %610 = vmatpush1.bf16.msra.mxu0 0
      %611 = vmatprep.subr.bf16.mxu0 0
      %612 = vmatpush1.bf16.msra.mxu0 0
      %613 = vmatprep.subr.bf16.mxu0 0
      %614 = vmatpush1.bf16.msra.mxu0 0
      %615 = vmatprep.subr.bf16.mxu0 0
      %616 = vmatpush1.bf16.msra.mxu0 %v599
      %617 = vmatprep.subr.bf16.mxu0 0
      %618 = vmatpush2.bf16.msra.mxu0 0
      %619 = vmatprep.subr.bf16.mxu0 0
      %620 = vmatpush2.bf16.msra.mxu0 0
      %621 = vmatprep.subr.bf16.mxu0 0
      %622 = vmatpush2.bf16.msra.mxu0 0
      %623 = vmatprep.subr.bf16.mxu0 0
      %624 = vmatpush2.bf16.msra.mxu0 0
      %625 = vmatprep.subr.bf16.mxu0 0
      %626 = vmatpush2.bf16.msra.mxu0 0
      %627 = vmatprep.subr.bf16.mxu0 0
      %628 = vmatpush2.bf16.msra.mxu0 0
      %629 = vmatprep.subr.bf16.mxu0 0
      %630 = vmatpush2.bf16.msra.mxu0 0
      %631 = vmatprep.subr.bf16.mxu0 0
      %632 = vmatpush2.bf16.msra.mxu0 0
      %633 = vmatprep.mubr.bf16.mxu0 0
      %634 = vmatmul.mubr.bf16.gmra.mxu0 %v592
      %v635 = vpop.f32.mrf.mxu0
      %v636 = vadd.f32 0.0, %v635
      %v637 = vpop.f32.mrf.mxu0
      %v638 = vpop.f32.mrf.mxu0
      %v639 = vadd.f32 0.0, %v638
      %v640 = vpop.f32.mrf.mxu0
      %641 = vmatprep.mubr.bf16.mxu0 0
      %642 = vmatmul.mubr.bf16.gmra.mxu0 %v595
      %v643 = vpop.f32.mrf.mxu0
      %v644 = vadd.f32 0.0, %v643
      %v645 = vpop.f32.mrf.mxu0
      %v646 = vpop.f32.mrf.mxu0
      %v647 = vadd.f32 0.0, %v646
      %v648 = vpop.f32.mrf.mxu0
      %649 = vdwg.mxu0
      %v650 = vadd.f32 %v549, %v636
      %v651 = vadd.f32 %v552, %v639
      %v652 = vadd.f32 %v557, %v644
      %v653 = vadd.f32 %v560, %v647
      %v654 = vld [vmem:[%s5] sm:$0x1]
      %v656 = vlaneseq
      %v657 = vshrl.u32 %v656, 7
      %v658 = vsub.s32 0, %v657
      %v659 = vrot.slane %v654, %v658
      %v661 = vadd.f32 %v650, %v659
      %v662 = vadd.f32 %v651, %v659
      %v663 = vadd.f32 %v652, %v659
      %v664 = vadd.f32 %v653, %v659
      %v665 = vmax.f32 %v661, 0.0
      %v666 = vmax.f32 %v662, 0.0
      %v667 = vmax.f32 %v663, 0.0
      %v668 = vmax.f32 %v664, 0.0
      %v669 = vld [vmem:[%s6] sm:$0xf]
      %v670 = vld [vmem:[%s6 + $0x4] sm:$0xf]
      %v671 = vld [vmem:[%s6 + $0x8] sm:$0xf]
      %v672 = vld [vmem:[%s6 + $0xc] sm:$0xf]
      %v673 = vld [vmem:[%s6 + $0x10] sm:$0xf]
      %v674 = vld [vmem:[%s6 + $0x14] sm:$0xf]
      %v675 = vld [vmem:[%s6 + $0x18] sm:$0xf]
      %v676 = vld [vmem:[%s6 + $0x1c] sm:$0xf]
      %v677 = vld [vmem:[%s6 + $0x20] sm:$0xf]
      %v678 = vld [vmem:[%s6 + $0x24] sm:$0xf]
      %v679 = vld [vmem:[%s6 + $0x28] sm:$0xf]
      %v680 = vld [vmem:[%s6 + $0x2c] sm:$0xf]
      %v681 = vld [vmem:[%s6 + $0x30] sm:$0xf]
      %v682 = vld [vmem:[%s6 + $0x34] sm:$0xf]
      %v683 = vld [vmem:[%s6 + $0x38] sm:$0xf]
      %v684 = vld [vmem:[%s6 + $0x3c] sm:$0xf]
      %v685 = vld [vmem:[%s7] sm:$0x1]
      %v686 = vpack.c.bf16 %v666, %v665
      %v687 = vpack.c.bf16 %v668, %v667
      %v689 = vlaneseq
      %v690 = vshrl.u32 %v689, 7
      %v691 = vsub.s32 0, %v690
      %v692 = vrot.slane %v685, %v691
      %v710 = vunpack.c.l.b16 %v669
      %v711 = vunpack.c.l.b16 %v670
      %v712 = vunpack.c.l.b16 %v671
      %v713 = vunpack.c.l.b16 %v672
      %v714 = vunpack.c.l.b16 %v673
      %v715 = vunpack.c.l.b16 %v674
      %v716 = vunpack.c.l.b16 %v675
      %v717 = vunpack.c.l.b16 %v676
      %v718 = vunpack.c.l.b16 %v677
      %v719 = vunpack.c.l.b16 %v678
      %v720 = vunpack.c.l.b16 %v679
      %v721 = vunpack.c.l.b16 %v680
      %v722 = vunpack.c.l.b16 %v681
      %v723 = vunpack.c.l.b16 %v682
      %v724 = vunpack.c.l.b16 %v683
      %v725 = vunpack.c.l.b16 %v684
      %v726 = vpack.c.b16 %v711, %v710
      %v727 = vpack.c.b16 %v713, %v712
      %v728 = vpack.c.b16 %v715, %v714
      %v729 = vpack.c.b16 %v717, %v716
      %v730 = vpack.c.b16 %v719, %v718
      %v731 = vpack.c.b16 %v721, %v720
      %v732 = vpack.c.b16 %v723, %v722
      %v733 = vpack.c.b16 %v725, %v724
      %742 = vmatprep.subr.bf16.mxu0 0
      %743 = vmatpush1.bf16.msra.mxu0 %v733
      %744 = vmatprep.subr.bf16.mxu0 0
      %745 = vmatpush1.bf16.msra.mxu0 %v732
      %746 = vmatprep.subr.bf16.mxu0 0
      %747 = vmatpush1.bf16.msra.mxu0 %v731
      %748 = vmatprep.subr.bf16.mxu0 0
      %749 = vmatpush1.bf16.msra.mxu0 %v730
      %750 = vmatprep.subr.bf16.mxu0 0
      %751 = vmatpush1.bf16.msra.mxu0 %v729
      %752 = vmatprep.subr.bf16.mxu0 0
      %753 = vmatpush1.bf16.msra.mxu0 %v728
      %754 = vmatprep.subr.bf16.mxu0 0
      %755 = vmatpush1.bf16.msra.mxu0 %v727
      %756 = vmatprep.subr.bf16.mxu0 0
      %757 = vmatpush1.bf16.msra.mxu0 %v726
      %758 = vmatprep.subr.bf16.mxu0 0
      %759 = vmatpush2.bf16.msra.mxu0 0
      %760 = vmatprep.subr.bf16.mxu0 0
      %761 = vmatpush2.bf16.msra.mxu0 0
      %762 = vmatprep.subr.bf16.mxu0 0
      %763 = vmatpush2.bf16.msra.mxu0 0
      %764 = vmatprep.subr.bf16.mxu0 0
      %765 = vmatpush2.bf16.msra.mxu0 0
      %766 = vmatprep.subr.bf16.mxu0 0
      %767 = vmatpush2.bf16.msra.mxu0 0
      %768 = vmatprep.subr.bf16.mxu0 0
      %769 = vmatpush2.bf16.msra.mxu0 0
      %770 = vmatprep.subr.bf16.mxu0 0
      %771 = vmatpush2.bf16.msra.mxu0 0
      %772 = vmatprep.subr.bf16.mxu0 0
      %773 = vmatpush2.bf16.msra.mxu0 0
      %774 = vmatprep.mubr.bf16.mxu0 0
      %775 = vmatmul.mubr.bf16.gmra.mxu0 %v686
      %v776 = vpop.f32.mrf.mxu0
      %v777 = vadd.f32 %v692, %v776
      %v778 = vpop.f32.mrf.mxu0
      %v779 = vpop.f32.mrf.mxu0
      %v780 = vadd.f32 %v692, %v779
      %v781 = vpop.f32.mrf.mxu0
      %782 = vmatprep.mubr.bf16.mxu0 0
      %783 = vmatmul.mubr.bf16.gmra.mxu0 %v687
      %v784 = vpop.f32.mrf.mxu0
      %v785 = vadd.f32 %v692, %v784
      %v786 = vpop.f32.mrf.mxu0
      %v787 = vpop.f32.mrf.mxu0
      %v788 = vadd.f32 %v692, %v787
      %v789 = vpop.f32.mrf.mxu0
      %790 = vdwg.mxu0
      %v791 = vmax.f32 %v777, 0.0
      %v792 = vmax.f32 %v780, 0.0
      %v793 = vmax.f32 %v785, 0.0
      %v794 = vmax.f32 %v788, 0.0
      %v795 = vld [vmem:[%s8] sm:$0xf]
      %v796 = vld [vmem:[%s8 + $0x4] sm:$0xf]
      %v797 = vld [vmem:[%s8 + $0x8] sm:$0xf]
      %v798 = vld [vmem:[%s8 + $0xc] sm:$0xf]
      %v799 = vld [vmem:[%s8 + $0x10] sm:$0xf]
      %v800 = vld [vmem:[%s8 + $0x14] sm:$0xf]
      %v801 = vld [vmem:[%s8 + $0x18] sm:$0xf]
      %v802 = vld [vmem:[%s8 + $0x1c] sm:$0xf]
      %v803 = vld [vmem:[%s8 + $0x20] sm:$0xf]
      %v804 = vld [vmem:[%s8 + $0x24] sm:$0xf]
      %v805 = vld [vmem:[%s8 + $0x28] sm:$0xf]
      %v806 = vld [vmem:[%s8 + $0x2c] sm:$0xf]
      %v807 = vld [vmem:[%s8 + $0x30] sm:$0xf]
      %v808 = vld [vmem:[%s8 + $0x34] sm:$0xf]
      %v809 = vld [vmem:[%s8 + $0x38] sm:$0xf]
      %v810 = vld [vmem:[%s8 + $0x3c] sm:$0xf]
      %v811 = vld [vmem:[%s9] sm:$0x1]
      %v812 = vpack.c.bf16 %v792, %v791
      %v813 = vpack.c.bf16 %v794, %v793
      %v815 = vlaneseq
      %v816 = vshrl.u32 %v815, 7
      %v817 = vsub.s32 0, %v816
      %v818 = vrot.slane %v811, %v817
      %v836 = vunpack.c.l.b16 %v795
      %v837 = vunpack.c.l.b16 %v796
      %v838 = vunpack.c.l.b16 %v797
      %v839 = vunpack.c.l.b16 %v798
      %v840 = vunpack.c.l.b16 %v799
      %v841 = vunpack.c.l.b16 %v800
      %v842 = vunpack.c.l.b16 %v801
      %v843 = vunpack.c.l.b16 %v802
      %v844 = vunpack.c.l.b16 %v803
      %v845 = vunpack.c.l.b16 %v804
      %v846 = vunpack.c.l.b16 %v805
      %v847 = vunpack.c.l.b16 %v806
      %v848 = vunpack.c.l.b16 %v807
      %v849 = vunpack.c.l.b16 %v808
      %v850 = vunpack.c.l.b16 %v809
      %v851 = vunpack.c.l.b16 %v810
      %v852 = vpack.c.b16 %v837, %v836
      %v853 = vpack.c.b16 %v839, %v838
      %v854 = vpack.c.b16 %v841, %v840
      %v855 = vpack.c.b16 %v843, %v842
      %v856 = vpack.c.b16 %v845, %v844
      %v857 = vpack.c.b16 %v847, %v846
      %v858 = vpack.c.b16 %v849, %v848
      %v859 = vpack.c.b16 %v851, %v850
      %868 = vmatprep.subr.bf16.mxu0 0
      %869 = vmatpush1.bf16.msra.mxu0 %v859
      %870 = vmatprep.subr.bf16.mxu0 0
      %871 = vmatpush1.bf16.msra.mxu0 %v858
      %872 = vmatprep.subr.bf16.mxu0 0
      %873 = vmatpush1.bf16.msra.mxu0 %v857
      %874 = vmatprep.subr.bf16.mxu0 0
      %875 = vmatpush1.bf16.msra.mxu0 %v856
      %876 = vmatprep.subr.bf16.mxu0 0
      %877 = vmatpush1.bf16.msra.mxu0 %v855
      %878 = vmatprep.subr.bf16.mxu0 0
      %879 = vmatpush1.bf16.msra.mxu0 %v854
      %880 = vmatprep.subr.bf16.mxu0 0
      %881 = vmatpush1.bf16.msra.mxu0 %v853
      %882 = vmatprep.subr.bf16.mxu0 0
      %883 = vmatpush1.bf16.msra.mxu0 %v852
      %884 = vmatprep.subr.bf16.mxu0 0
      %885 = vmatpush2.bf16.msra.mxu0 0
      %886 = vmatprep.subr.bf16.mxu0 0
      %887 = vmatpush2.bf16.msra.mxu0 0
      %888 = vmatprep.subr.bf16.mxu0 0
      %889 = vmatpush2.bf16.msra.mxu0 0
      %890 = vmatprep.subr.bf16.mxu0 0
      %891 = vmatpush2.bf16.msra.mxu0 0
      %892 = vmatprep.subr.bf16.mxu0 0
      %893 = vmatpush2.bf16.msra.mxu0 0
      %894 = vmatprep.subr.bf16.mxu0 0
      %895 = vmatpush2.bf16.msra.mxu0 0
      %896 = vmatprep.subr.bf16.mxu0 0
      %897 = vmatpush2.bf16.msra.mxu0 0
      %898 = vmatprep.subr.bf16.mxu0 0
      %899 = vmatpush2.bf16.msra.mxu0 0
      %900 = vmatprep.mubr.bf16.mxu0 0
      %901 = vmatmul.mubr.bf16.gmra.mxu0 %v812
      %v902 = vpop.f32.mrf.mxu0
      %v903 = vadd.f32 %v818, %v902
      %v904 = vpop.f32.mrf.mxu0
      %v905 = vpop.f32.mrf.mxu0
      %v906 = vadd.f32 %v818, %v905
      %v907 = vpop.f32.mrf.mxu0
      %908 = vmatprep.mubr.bf16.mxu0 0
      %909 = vmatmul.mubr.bf16.gmra.mxu0 %v813
      %v910 = vpop.f32.mrf.mxu0
      %v911 = vadd.f32 %v818, %v910
      %v912 = vpop.f32.mrf.mxu0
      %v913 = vpop.f32.mrf.mxu0
      %v914 = vadd.f32 %v818, %v913
      %v915 = vpop.f32.mrf.mxu0
      %916 = vdwg.mxu0
      %vm917 = vcmask 15360
      %918 = vst.msk [vmem:[%s383] sm:$0xff] %vm917, %v903
      %919 = vst.msk [vmem:[%s383 + $0x8] sm:$0xff] %vm917, %v906
      %920 = vst.msk [vmem:[%s383 + $0x10] sm:$0xff] %vm917, %v911
      %921 = vst.msk [vmem:[%s383 + $0x18] sm:$0xff] %vm917, %v914
      %s922 = smul.u32 4, %s21
      %p923 = scmp.lt.s32.totalorder %s922, 7
      %s924 = scalar_select %p923, %s922, 7
      %s925 = smul.addr %s924, 8
      %s926 = scalar_lea.vmem %s10, %s925
      // Predicated region
      $region61: #{tpu_custom_call.1} parent=59 // pred_check
        %p927 = pneg %p259
      $region62: #{tpu_custom_call.1} parent=59 // pred_check_branch
        %929 = sbr.rel (%p927) target = $region64
      $region63: #{tpu_custom_call.1} parent=59 // pred_region
        %s930 = smul.u32 4, %s21
      $region64: #{tpu_custom_call.1} parent=59 // pred_fallthru
        _
    $region60: #{tpu_custom_call.1} parent=5 // pred_fallthru
      _
    %p931 = scmp.le.s32.totalorder 2, %s16
    // Predicated region
    $region65: #{tpu_custom_call.1} parent=5 // pred_check
      %p932 = pneg %p931
    $region66: #{tpu_custom_call.1} parent=5 // pred_check_branch
      %934 = sbr.rel (%p932) target = $region68
    $region67: #{tpu_custom_call.1} parent=5 // pred_region
      %s935 = ssub.s32 %s16, 2
      // Predicated region
      $region69: #{tpu_custom_call.1} parent=67 // pred_check
        %p936 = pneg %p265
      $region70: #{tpu_custom_call.1} parent=67 // pred_check_branch
        %938 = sbr.rel (%p936) target = $region72
      $region71: #{tpu_custom_call.1} parent=67 // pred_region
        %s939 = smul.u32 4, %s22
        %p940 = scmp.lt.s32.totalorder %s939, 7
        %s941 = scalar_select %p940, %s939, 7
        %s942 = smul.addr %s941, 8
        %s943 = scalar_lea.vmem %s10, %s942
      $region72: #{tpu_custom_call.1} parent=67 // pred_fallthru
        _
    $region68: #{tpu_custom_call.1} parent=5 // pred_fallthru
      _
  $region6: #{tpu_custom_call.1} parent=0 // loop_footer
    %s20 = sadd.s32 1, %s16
  $region7: #{tpu_custom_call.1} parent=0 // loop_footer_branch
    %15 = sbr.rel target = $region3
  $region8: #{tpu_custom_call.1} parent=0 // loop_exit
    _

</llo_original>
